<compile_context>
chip_gen: v6e
topology: v6e:2x2x1
jax: 0.10.0
libtpu: 0.0.40
codegen_flags: <defaults>
</compile_context>

<pallas_src>
import jax
import jax.numpy as jnp
from jax.experimental import pallas as pl
from jax.experimental.pallas import tpu as pltpu

INPUT_DIM = 128
OUT_WIDTH = 128      # packed lanes: [0:64] enc, [64:68] softmax probs, [68] sigmoid
BN_EPS = 1e-5
MAX_TILE_B = 1024


# --------------------------------------------------------------------------- #
# Kernel
# --------------------------------------------------------------------------- #
def _detector_kernel(
    x_ref,                      # (tb, 128)  f32 input block
    w1_ref, b1_ref,             # Linear(128,256)                     (bf16 / f32)
    w2_ref, b2_ref,             # Linear(256,128) with BN(256) folded (bf16 / f32)
    w34_ref, b34_ref,           # fused [w3 | w3 @ head1]: (128,128)  (bf16 / f32)
    wh2_ref, bh2_ref,           # padded head stage 2:     (128,128)  (bf16 / f32)
    out_ref,                    # (tb, 128)  bf16 packed output
):
    f32 = jnp.float32
    bf16 = jnp.bfloat16

    # ----- encoder (BN folded into W2/W34; Dropout is identity in eval mode) -----
    x = x_ref[...].astype(bf16)                     # in-kernel cast, no extra HBM pass
    h1 = jnp.dot(x, w1_ref[...], preferred_element_type=f32) + b1_ref[...]
    h1 = jnp.maximum(h1, 0.0)
    h2 = jnp.dot(h1.astype(bf16), w2_ref[...], preferred_element_type=f32) + b2_ref[...]
    h2 = jnp.maximum(h2, 0.0)

    # fused stage: lanes 0:64 = enc (no activation), lanes 64:128 = head hidden (pre-ReLU)
    g = jnp.dot(h2.astype(bf16), w34_ref[...], preferred_element_type=f32) + b34_ref[...]

    # head stage 2: zero rows for lanes 0:64 kill the (irrelevantly ReLU'd) enc lanes;
    # result lanes 64:68 = threat logits, lane 68 = anomaly logit, rest = 0.
    head = jnp.dot(jnp.maximum(g, 0.0).astype(bf16), wh2_ref[...],
                   preferred_element_type=f32) + bh2_ref[...]

    lane = jax.lax.broadcasted_iota(jnp.int32, head.shape, dimension=1)
    is_threat = (lane >= 64) & (lane < 68)
    is_anom = lane == 68

    # masked softmax over lanes 64:68 (threat classifier) -- f32 epilogue
    masked = jnp.where(is_threat, head, -1e30)
    m = jnp.max(masked, axis=-1, keepdims=True)
    e = jnp.where(is_threat, jnp.exp(head - m), 0.0)
    denom = jnp.sum(e, axis=-1, keepdims=True)
    probs = e * pl.reciprocal(denom, approx=True)            # EUP, not VALU divide

    # sigmoid (only lane 68 is kept)
    sig = pl.reciprocal(1.0 + jnp.exp(-head), approx=True)

    head_post = jnp.where(is_threat, probs, jnp.where(is_anom, sig, 0.0))

    # single lane-dense 128-wide store, bf16 -> one small unmasked output DMA / block
    out_ref[...] = jnp.where(lane < 64, g, head_post).astype(out_ref.dtype)


# --------------------------------------------------------------------------- #
# Parameters
# --------------------------------------------------------------------------- #
def init_raw_params(key, input_dim: int = INPUT_DIM):
    """Deterministic synthetic parameters mirroring the PyTorch module (fp32)."""
    def linear(k, fan_in, fan_out):
        kw, kb = jax.random.split(k)
        bound = 1.0 / jnp.sqrt(fan_in)
        w = jax.random.uniform(kw, (fan_in, fan_out), jnp.float32, -bound, bound)
        b = jax.random.uniform(kb, (1, fan_out), jnp.float32, -bound, bound)
        return w, b

    def batchnorm(k, n):
        k1, k2 = jax.random.split(k)
        gamma = 1.0 + 0.1 * jax.random.normal(k1, (1, n), jnp.float32)
        beta = 0.1 * jax.random.normal(k2, (1, n), jnp.float32)
        running_mean = jnp.zeros((1, n), jnp.float32)
        running_var = jnp.ones((1, n), jnp.float32)
        return gamma, beta, running_mean, running_var

    keys = jax.random.split(key, 9)
    w1, b1 = linear(keys[0], input_dim, 256)
    bn1 = batchnorm(keys[1], 256)
    w2, b2 = linear(keys[2], 256, 128)
    bn2 = batchnorm(keys[3], 128)
    w3, b3 = linear(keys[4], 128, 64)
    wt1, bt1 = linear(keys[5], 64, 32)
    wt2, bt2 = linear(keys[6], 32, 4)
    wa1, ba1 = linear(keys[7], 64, 32)
    wa2, ba2 = linear(keys[8], 32, 1)
    return (w1, b1, bn1, w2, b2, bn2, w3, b3,
            wt1, bt1, wt2, bt2, wa1, ba1, wa2, ba2)


def prepare_kernel_params(raw):
    """One-time offline prep: fold eval-mode BN into the following Linear,
    fuse w3 with the first head stage, pad the second head stage to a single
    lane-dense matmul, cast MXU operands to bf16 (biases stay fp32)."""
    (w1, b1, bn1, w2, b2, bn2, w3, b3,
     wt1, bt1, wt2, bt2, wa1, ba1, wa2, ba2) = raw

    def fold(p):
        gamma, beta, mean, var = p
        scale = gamma / jnp.sqrt(var + BN_EPS)      # (1, N)
        shift = beta - mean * scale                 # (1, N)
        return scale, shift

    # BN sits after ReLU and before the next Linear, so fold forward is exact:
    #   (relu(h)*s + t) @ W + b == relu(h) @ (s^T * W) + (t @ W + b)
    s1, t1 = fold(bn1)
    s2, t2 = fold(bn2)
    w2f = w2 * s1.reshape(-1, 1)
    b2f = t1 @ w2 + b2
    w3f = w3 * s2.reshape(-1, 1)
    b3f = t2 @ w3 + b3

    # Head stage 1 of both heads: (64, 64) = [wt1 | wa1].
    wh1 = jnp.concatenate([wt1, wa1], axis=1)       # (64, 64)
    bh1 = jnp.concatenate([bt1, ba1], axis=1)       # (1, 64)

    # Fuse w3f with head stage 1:
    #   g = h2 @ W34 + b34, lanes 0:64 = enc, lanes 64:128 = enc @ wh1 + bh1.
    w34 = jnp.concatenate([w3f, w3f @ wh1], axis=1)           # (128, 128)
    b34 = jnp.concatenate([b3f, b3f @ wh1 + bh1], axis=1)     # (1, 128)

    # Head stage 2, padded to (128, 128): zero rows for enc lanes, outputs land
    # on lanes 64:68 (threat logits) and 68 (anomaly logit).
    wh2 = jnp.zeros((128, 128), jnp.float32)
    wh2 = wh2.at[64:96, 64:68].set(wt2)
    wh2 = wh2.at[96:128, 68:69].set(wa2)
    bh2 = jnp.zeros((1, 128), jnp.float32)
    bh2 = bh2.at[:, 64:68].set(bt2)
    bh2 = bh2.at[:, 68:69].set(ba2)

    bf = lambda w: w.astype(jnp.bfloat16)
    return (bf(w1), b1, bf(w2f), b2f, bf(w34), b34, bf(wh2), bh2)


# --------------------------------------------------------------------------- #
# Wrapper
# --------------------------------------------------------------------------- #
def _round_up(n, m):
    return ((n + m - 1) // m) * m


@jax.jit
def adversarial_detector_forward_packed(x, kparams):
    """Returns the packed (batch, 128) bf16 output:
       lanes [0:64] encoded, [64:68] threat softmax probs, [68] anomaly sigmoid."""
    batch = x.shape[0]
    # >=2 grid steps for mid/large batches (v7x megacore), multiple of 16 for
    # bf16 sublane packing, clamped so tiny batches stay a single full block.
    tile_b = min(MAX_TILE_B,
                 _round_up(pl.cdiv(batch, 2), 16),
                 _round_up(batch, 8))
    grid = (pl.cdiv(batch, tile_b),)

    weight_specs = [pl.BlockSpec(p.shape, lambda i: (0, 0)) for p in kparams]
    weight_bytes = sum(p.size * p.dtype.itemsize for p in kparams)

    cost = pl.CostEstimate(
        flops=2 * batch * (128 * 256 + 256 * 128 + 128 * 128 + 128 * 128),
        transcendentals=batch * 2 * OUT_WIDTH,
        bytes_accessed=batch * (INPUT_DIM * 4 + OUT_WIDTH * 2) + weight_bytes,
    )

    return pl.pallas_call(
        _detector_kernel,
        out_shape=jax.ShapeDtypeStruct((batch, OUT_WIDTH), jnp.bfloat16),
        grid=grid,
        in_specs=[pl.BlockSpec((tile_b, INPUT_DIM), lambda i: (i, 0))] + weight_specs,
        out_specs=pl.BlockSpec((tile_b, OUT_WIDTH), lambda i: (i, 0)),
        compiler_params=pltpu.CompilerParams(dimension_semantics=("parallel",)),
        cost_estimate=cost,
    )(x, *kparams)


def unpack_outputs(packed):
    """Split the packed kernel output into the module's three outputs.
    Done outside jit, only where the pieces are actually consumed."""
    encoded = packed[:, 0:64]
    threat_probs = packed[:, 64:68].astype(jnp.float32)
    anomaly_score = packed[:, 68:69].astype(jnp.float32)
    return encoded, threat_probs, anomaly_score


# --------------------------------------------------------------------------- #
# Pure-JAX fp32 reference (original, un-folded module semantics)
# --------------------------------------------------------------------------- #
def reference_forward(x, raw):
    (w1, b1, bn1, w2, b2, bn2, w3, b3,
     wt1, bt1, wt2, bt2, wa1, ba1, wa2, ba2) = raw

    def bn(h, p):
        gamma, beta, mean, var = p
        return (h - mean) * (gamma / jnp.sqrt(var + BN_EPS)) + beta

    h = jnp.maximum(x @ w1 + b1, 0.0)
    h = bn(h, bn1)                      # Dropout(0.3) is identity in eval mode
    h = jnp.maximum(h @ w2 + b2, 0.0)
    h = bn(h, bn2)
    enc = h @ w3 + b3
    t = jnp.maximum(enc @ wt1 + bt1, 0.0)
    probs = jax.nn.softmax(t @ wt2 + bt2, axis=1)
    a = jnp.maximum(enc @ wa1 + ba1, 0.0)
    score = jax.nn.sigmoid(a @ wa2 + ba2)
    return enc, probs, score


# --------------------------------------------------------------------------- #
if __name__ == "__main__":
    batch = 8
    key = jax.random.PRNGKey(0)
    k_x, k_p = jax.random.split(key)
    x = jax.random.normal(k_x, (batch, INPUT_DIM), jnp.float32)

    raw_params = init_raw_params(k_p, INPUT_DIM)
    kparams = prepare_kernel_params(raw_params)

    packed = adversarial_detector_forward_packed(x, kparams)
    jax.block_until_ready(packed)

    encoded, threat_probs, anomaly_score = unpack_outputs(packed)
    assert encoded.shape == (batch, 64)
    assert threat_probs.shape == (batch, 4)
    assert anomaly_score.shape == (batch, 1)

    # compare against the fp32 reference (tolerance covers bf16 MXU operands,
    # the bf16 packed output and the EUP approximate reciprocals)
    enc_ref, probs_ref, anom_ref = reference_forward(x, raw_params)
    assert bool(jnp.allclose(encoded.astype(jnp.float32), enc_ref, atol=5e-2, rtol=5e-2))
    assert bool(jnp.allclose(threat_probs, probs_ref, atol=3e-2, rtol=5e-2))
    assert bool(jnp.allclose(anomaly_score, anom_ref, atol=3e-2, rtol=5e-2))

    print("KERNEL_OK")
</pallas_src>

<mosaic_0001>
module attributes {stable_mosaic.version = 11 : i64} {
  func.func @_detector_kernel(%arg0: i32, %arg1: memref<8x128xf32, #tpu.memory_space<vmem>>, %arg2: memref<128x256xbf16, #tpu.memory_space<vmem>>, %arg3: memref<1x256xf32, #tpu.memory_space<vmem>>, %arg4: memref<256x128xbf16, #tpu.memory_space<vmem>>, %arg5: memref<1x128xf32, #tpu.memory_space<vmem>>, %arg6: memref<128x128xbf16, #tpu.memory_space<vmem>>, %arg7: memref<1x128xf32, #tpu.memory_space<vmem>>, %arg8: memref<128x128xbf16, #tpu.memory_space<vmem>>, %arg9: memref<1x128xf32, #tpu.memory_space<vmem>>, %arg10: memref<8x128xbf16, #tpu.memory_space<vmem>>) attributes {dimension_semantics = [#tpu.dimension_semantics<parallel>], iteration_bounds = array<i64: 1>, scalar_prefetch = 0 : i64, scratch_operands = 0 : i64, tpu.core_type = #tpu.core_type<tc>, window_params = [{transform_indices = @transform_0, window_bounds = array<i64: 8, 128>}, {pipeline_mode = #tpu.pipeline_mode<synchronous>, transform_indices = @transform_1, window_bounds = array<i64: 128, 256>}, {pipeline_mode = #tpu.pipeline_mode<synchronous>, transform_indices = @transform_2, window_bounds = array<i64: 1, 256>}, {pipeline_mode = #tpu.pipeline_mode<synchronous>, transform_indices = @transform_3, window_bounds = array<i64: 256, 128>}, {pipeline_mode = #tpu.pipeline_mode<synchronous>, transform_indices = @transform_4, window_bounds = array<i64: 1, 128>}, {pipeline_mode = #tpu.pipeline_mode<synchronous>, transform_indices = @transform_5, window_bounds = array<i64: 128, 128>}, {pipeline_mode = #tpu.pipeline_mode<synchronous>, transform_indices = @transform_6, window_bounds = array<i64: 1, 128>}, {pipeline_mode = #tpu.pipeline_mode<synchronous>, transform_indices = @transform_7, window_bounds = array<i64: 128, 128>}, {pipeline_mode = #tpu.pipeline_mode<synchronous>, transform_indices = @transform_8, window_bounds = array<i64: 1, 128>}, {transform_indices = @transform_9, window_bounds = array<i64: 8, 128>}]} {
    %c0 = arith.constant 0 : index
    %c0_0 = arith.constant 0 : index
    %0 = vector.load %arg1[%c0, %c0_0] : memref<8x128xf32, #tpu.memory_space<vmem>>, vector<8x128xf32>
    %1 = arith.truncf %0 : vector<8x128xf32> to vector<8x128xbf16>
    %c0_1 = arith.constant 0 : index
    %c0_2 = arith.constant 0 : index
    %2 = vector.load %arg2[%c0_1, %c0_2] : memref<128x256xbf16, #tpu.memory_space<vmem>>, vector<128x256xbf16>
    %cst = arith.constant dense<0.000000e+00> : vector<8x256xf32>
    %3 = tpu.matmul %1, %2, %cst {dimension_numbers = #tpu.dot_dimension_numbers<[1], [0], [0], [1], [0, 0, 1, 1], [], []>} : vector<8x128xbf16>, vector<128x256xbf16>, vector<8x256xf32> -> vector<8x256xf32>
    %c0_3 = arith.constant 0 : index
    %c0_4 = arith.constant 0 : index
    %4 = vector.load %arg3[%c0_3, %c0_4] : memref<1x256xf32, #tpu.memory_space<vmem>>, vector<1x256xf32>
    %5 = vector.broadcast %4 : vector<1x256xf32> to vector<8x256xf32>
    %6 = arith.addf %3, %5 : vector<8x256xf32>
    %cst_5 = arith.constant 0.000000e+00 : f32
    %7 = vector.broadcast %cst_5 : f32 to vector<8x256xf32>
    %8 = arith.maximumf %6, %7 : vector<8x256xf32>
    %9 = arith.truncf %8 : vector<8x256xf32> to vector<8x256xbf16>
    %c0_6 = arith.constant 0 : index
    %c0_7 = arith.constant 0 : index
    %10 = vector.load %arg4[%c0_6, %c0_7] : memref<256x128xbf16, #tpu.memory_space<vmem>>, vector<256x128xbf16>
    %cst_8 = arith.constant dense<0.000000e+00> : vector<8x128xf32>
    %11 = tpu.matmul %9, %10, %cst_8 {dimension_numbers = #tpu.dot_dimension_numbers<[1], [0], [0], [1], [0, 0, 1, 1], [], []>} : vector<8x256xbf16>, vector<256x128xbf16>, vector<8x128xf32> -> vector<8x128xf32>
    %c0_9 = arith.constant 0 : index
    %c0_10 = arith.constant 0 : index
    %12 = vector.load %arg5[%c0_9, %c0_10] : memref<1x128xf32, #tpu.memory_space<vmem>>, vector<1x128xf32>
    %13 = vector.broadcast %12 : vector<1x128xf32> to vector<8x128xf32>
    %14 = arith.addf %11, %13 : vector<8x128xf32>
    %cst_11 = arith.constant 0.000000e+00 : f32
    %15 = vector.broadcast %cst_11 : f32 to vector<8x128xf32>
    %16 = arith.maximumf %14, %15 : vector<8x128xf32>
    %17 = arith.truncf %16 : vector<8x128xf32> to vector<8x128xbf16>
    %c0_12 = arith.constant 0 : index
    %c0_13 = arith.constant 0 : index
    %18 = vector.load %arg6[%c0_12, %c0_13] : memref<128x128xbf16, #tpu.memory_space<vmem>>, vector<128x128xbf16>
    %cst_14 = arith.constant dense<0.000000e+00> : vector<8x128xf32>
    %19 = tpu.matmul %17, %18, %cst_14 {dimension_numbers = #tpu.dot_dimension_numbers<[1], [0], [0], [1], [0, 0, 1, 1], [], []>} : vector<8x128xbf16>, vector<128x128xbf16>, vector<8x128xf32> -> vector<8x128xf32>
    %c0_15 = arith.constant 0 : index
    %c0_16 = arith.constant 0 : index
    %20 = vector.load %arg7[%c0_15, %c0_16] : memref<1x128xf32, #tpu.memory_space<vmem>>, vector<1x128xf32>
    %21 = vector.broadcast %20 : vector<1x128xf32> to vector<8x128xf32>
    %22 = arith.addf %19, %21 : vector<8x128xf32>
    %cst_17 = arith.constant 0.000000e+00 : f32
    %23 = vector.broadcast %cst_17 : f32 to vector<8x128xf32>
    %24 = arith.maximumf %22, %23 : vector<8x128xf32>
    %25 = arith.truncf %24 : vector<8x128xf32> to vector<8x128xbf16>
    %c0_18 = arith.constant 0 : index
    %c0_19 = arith.constant 0 : index
    %26 = vector.load %arg8[%c0_18, %c0_19] : memref<128x128xbf16, #tpu.memory_space<vmem>>, vector<128x128xbf16>
    %cst_20 = arith.constant dense<0.000000e+00> : vector<8x128xf32>
    %27 = tpu.matmul %25, %26, %cst_20 {dimension_numbers = #tpu.dot_dimension_numbers<[1], [0], [0], [1], [0, 0, 1, 1], [], []>} : vector<8x128xbf16>, vector<128x128xbf16>, vector<8x128xf32> -> vector<8x128xf32>
    %c0_21 = arith.constant 0 : index
    %c0_22 = arith.constant 0 : index
    %28 = vector.load %arg9[%c0_21, %c0_22] : memref<1x128xf32, #tpu.memory_space<vmem>>, vector<1x128xf32>
    %29 = vector.broadcast %28 : vector<1x128xf32> to vector<8x128xf32>
    %30 = arith.addf %27, %29 : vector<8x128xf32>
    %31 = tpu.iota {dimensions = array<i32: 1>} : vector<8x128xi32>
    %c64_i32 = arith.constant 64 : i32
    %32 = vector.broadcast %c64_i32 : i32 to vector<8x128xi32>
    %33 = arith.cmpi sge, %31, %32 : vector<8x128xi32>
    %c68_i32 = arith.constant 68 : i32
    %34 = vector.broadcast %c68_i32 : i32 to vector<8x128xi32>
    %35 = arith.cmpi slt, %31, %34 : vector<8x128xi32>
    %36 = arith.andi %33, %35 : vector<8x128xi1>
    %c68_i32_23 = arith.constant 68 : i32
    %37 = vector.broadcast %c68_i32_23 : i32 to vector<8x128xi32>
    %38 = arith.cmpi eq, %31, %37 : vector<8x128xi32>
    %cst_24 = arith.constant -1.000000e+30 : f32
    %39 = vector.broadcast %cst_24 : f32 to vector<8x128xf32>
    %40 = arith.select %36, %30, %39 : vector<8x128xi1>, vector<8x128xf32>
    %cst_25 = arith.constant dense<0xFF800000> : vector<8xf32>
    %41 = vector.multi_reduction <maximumf>, %40, %cst_25 [1] : vector<8x128xf32> to vector<8xf32>
    %42 = vector.shape_cast %41 : vector<8xf32> to vector<8x1xf32>
    %43 = vector.broadcast %42 : vector<8x1xf32> to vector<8x128xf32>
    %44 = arith.subf %30, %43 : vector<8x128xf32>
    %45 = math.exp %44 : vector<8x128xf32>
    %cst_26 = arith.constant 0.000000e+00 : f32
    %46 = vector.broadcast %cst_26 : f32 to vector<8x128xf32>
    %47 = arith.select %36, %45, %46 : vector<8x128xi1>, vector<8x128xf32>
    %cst_27 = arith.constant dense<0.000000e+00> : vector<8xf32>
    %48 = vector.multi_reduction <add>, %47, %cst_27 [1] : vector<8x128xf32> to vector<8xf32>
    %49 = vector.shape_cast %48 : vector<8xf32> to vector<8x1xf32>
    %50 = tpu.reciprocal %49 {approx = true} : vector<8x1xf32> -> vector<8x1xf32>
    %51 = vector.broadcast %50 : vector<8x1xf32> to vector<8x128xf32>
    %52 = arith.mulf %47, %51 : vector<8x128xf32>
    %cst_28 = arith.constant 0.000000e+00 : f32
    %53 = vector.broadcast %cst_28 : f32 to vector<8x128xf32>
    %54 = arith.subf %53, %30 : vector<8x128xf32>
    %55 = math.exp %54 : vector<8x128xf32>
    %cst_29 = arith.constant 1.000000e+00 : f32
    %56 = vector.broadcast %cst_29 : f32 to vector<8x128xf32>
    %57 = arith.addf %56, %55 : vector<8x128xf32>
    %58 = tpu.reciprocal %57 {approx = true} : vector<8x128xf32> -> vector<8x128xf32>
    %cst_30 = arith.constant 0.000000e+00 : f32
    %59 = vector.broadcast %cst_30 : f32 to vector<8x128xf32>
    %60 = arith.select %38, %58, %59 : vector<8x128xi1>, vector<8x128xf32>
    %61 = arith.select %36, %52, %60 : vector<8x128xi1>, vector<8x128xf32>
    %c64_i32_31 = arith.constant 64 : i32
    %62 = vector.broadcast %c64_i32_31 : i32 to vector<8x128xi32>
    %63 = arith.cmpi slt, %31, %62 : vector<8x128xi32>
    %64 = arith.select %63, %22, %61 : vector<8x128xi1>, vector<8x128xf32>
    %65 = arith.truncf %64 : vector<8x128xf32> to vector<8x128xbf16>
    %c0_32 = arith.constant 0 : index
    %c0_33 = arith.constant 0 : index
    %66 = vector.load %arg10[%c0_32, %c0_33] : memref<8x128xbf16, #tpu.memory_space<vmem>>, vector<8x128xbf16>
    tpu.vector_store %arg10[%c0_32, %c0_33], %65 {strides = array<i32>} : memref<8x128xbf16, #tpu.memory_space<vmem>>, vector<8x128xbf16>,
    return
  }
  func.func @transform_0(%arg0: i32) -> (i32, i32) {
    %c0_i32 = arith.constant 0 : i32
    %c0_i32_0 = arith.constant 0 : i32
    return %arg0, %c0_i32 : i32, i32
  }
  func.func @transform_1(%arg0: i32) -> (i32, i32) {
    %c0_i32 = arith.constant 0 : i32
    %c0_i32_0 = arith.constant 0 : i32
    %c0_i32_1 = arith.constant 0 : i32
    return %c0_i32, %c0_i32_0 : i32, i32
  }
  func.func @transform_2(%arg0: i32) -> (i32, i32) {
    %c0_i32 = arith.constant 0 : i32
    %c0_i32_0 = arith.constant 0 : i32
    %c0_i32_1 = arith.constant 0 : i32
    return %c0_i32, %c0_i32_0 : i32, i32
  }
  func.func @transform_3(%arg0: i32) -> (i32, i32) {
    %c0_i32 = arith.constant 0 : i32
    %c0_i32_0 = arith.constant 0 : i32
    %c0_i32_1 = arith.constant 0 : i32
    return %c0_i32, %c0_i32_0 : i32, i32
  }
  func.func @transform_4(%arg0: i32) -> (i32, i32) {
    %c0_i32 = arith.constant 0 : i32
    %c0_i32_0 = arith.constant 0 : i32
    %c0_i32_1 = arith.constant 0 : i32
    return %c0_i32, %c0_i32_0 : i32, i32
  }
  func.func @transform_5(%arg0: i32) -> (i32, i32) {
    %c0_i32 = arith.constant 0 : i32
    %c0_i32_0 = arith.constant 0 : i32
    %c0_i32_1 = arith.constant 0 : i32
    return %c0_i32, %c0_i32_0 : i32, i32
  }
  func.func @transform_6(%arg0: i32) -> (i32, i32) {
    %c0_i32 = arith.constant 0 : i32
    %c0_i32_0 = arith.constant 0 : i32
    %c0_i32_1 = arith.constant 0 : i32
    return %c0_i32, %c0_i32_0 : i32, i32
  }
  func.func @transform_7(%arg0: i32) -> (i32, i32) {
    %c0_i32 = arith.constant 0 : i32
    %c0_i32_0 = arith.constant 0 : i32
    %c0_i32_1 = arith.constant 0 : i32
    return %c0_i32, %c0_i32_0 : i32, i32
  }
  func.func @transform_8(%arg0: i32) -> (i32, i32) {
    %c0_i32 = arith.constant 0 : i32
    %c0_i32_0 = arith.constant 0 : i32
    %c0_i32_1 = arith.constant 0 : i32
    return %c0_i32, %c0_i32_0 : i32, i32
  }
  func.func @transform_9(%arg0: i32) -> (i32, i32) {
    %c0_i32 = arith.constant 0 : i32
    %c0_i32_0 = arith.constant 0 : i32
    return %arg0, %c0_i32 : i32, i32
  }
}

</mosaic_0001>

<llo_original>
// kernel: adversarial_detector_forward_packed.1
$region0: #{adversarial_detector_forward_packed.1}
  #allocation0 [shape = 'u32[]', space=smem, size = 0x4, offset = 0x4, fixed_abs, tag = 'smem constant byte address 0x4 - core index']
  #allocation1 [shape = 'u32[144,128]{1,0:T(1,128)}', space=vmem, size = 0x12000, scoped, tag = 'internal scratch']
  %s0 = inlined_call_operand.hbm [shape: f32[8,128], index: 0, kind: input, shape index: {}]
  %s1 = inlined_call_operand.hbm [shape: bf16[128,256], index: 1, kind: input, shape index: {}]
  %s2 = inlined_call_operand.vmem [shape: f32[1,256], index: 2, kind: input, shape index: {}]
  %s3 = inlined_call_operand.hbm [shape: bf16[256,128], index: 3, kind: input, shape index: {}]
  %s4 = inlined_call_operand.vmem [shape: f32[1,128], index: 4, kind: input, shape index: {}]
  %s5 = inlined_call_operand.hbm [shape: bf16[128,128], index: 5, kind: input, shape index: {}]
  %s6 = inlined_call_operand.vmem [shape: f32[1,128], index: 6, kind: input, shape index: {}]
  %s7 = inlined_call_operand.hbm [shape: bf16[128,128], index: 7, kind: input, shape index: {}]
  %s8 = inlined_call_operand.vmem [shape: f32[1,128], index: 8, kind: input, shape index: {}]
  %s9 = inlined_call_operand.hbm [shape: bf16[8,128], index: 9, kind: output, shape index: {}]
  %s10 = sld [smem:[#allocation0]]
  $region66: #{adversarial_detector_forward_packed.1} parent=0
    _
  %s12 = ssub.s32 1, %s10
  %s13 = scalar_select 0, %s12, %s10
  $region1: #{adversarial_detector_forward_packed.1} parent=0
    #allocation2 [shape = 'u8[4096]{0}', space=vmem, size = 0x1000, scoped, tag = 'input window, operand 0, single buffered']
    #allocation3 [shape = 's32[1]{0}', space=sflag, size = 0x4, scoped, tag = 'scoped memory for adversarial_detector_forward_packed.1']
    #allocation4 [shape = 's32[1]{0}', space=sflag, size = 0x4, scoped, tag = 'scoped memory for adversarial_detector_forward_packed.1']
    #allocation5 [shape = 'u8[65536]{0}', space=vmem, size = 0x10000, scoped, tag = 'input window, operand 1, single buffered']
    #allocation6 [shape = 's32[1]{0}', space=sflag, size = 0x4, scoped, tag = 'scoped memory for adversarial_detector_forward_packed.1']
    #allocation7 [shape = 'u8[65536]{0}', space=vmem, size = 0x10000, scoped, tag = 'input window, operand 3, single buffered']
    #allocation8 [shape = 'u8[32768]{0}', space=vmem, size = 0x8000, scoped, tag = 'input window, operand 5, single buffered']
    #allocation9 [shape = 's32[1]{0}', space=sflag, size = 0x4, scoped, tag = 'scoped memory for adversarial_detector_forward_packed.1']
    #allocation10 [shape = 'u8[32768]{0}', space=vmem, size = 0x8000, scoped, tag = 'input window, operand 7, single buffered']
    #allocation11 [shape = 'u8[2048]{0}', space=vmem, size = 0x800, scoped, tag = 'output window, operand 0, single buffered']
    %14 = vsyncpa [#allocation3], 0
    %15 = vsyncpa [#allocation6], 0
    %16 = vsyncpa [#allocation9], 0
    %17 = vsyncpa [#allocation4], 0
    // Predicated region
    $region2: #{adversarial_detector_forward_packed.1} parent=1 // pred_check
      _
    $region3: #{adversarial_detector_forward_packed.1} parent=1 // pred_check_branch
      %19 = sbr.rel (0) target = $region5
    $region4: #{adversarial_detector_forward_packed.1} parent=1 // pred_region
      %s21 = ssub.s32 128, 128
      %22 = vsyncadd [#allocation3], %s21
      %s24 = sshll.u32 [#allocation2], 4
      %s25 = int_to_ptr.vmem [resolvable:$true] %s24
      %27 = dma.hbm_to_vmem [thread:$0]  %s0, 128, %s25, [#allocation3]
    $region5: #{adversarial_detector_forward_packed.1} parent=1 // pred_fallthru
      _
    // Predicated region
    $region6: #{adversarial_detector_forward_packed.1} parent=1 // pred_check
      _
    $region7: #{adversarial_detector_forward_packed.1} parent=1 // pred_check_branch
      %29 = sbr.rel (0) target = $region9
    $region8: #{adversarial_detector_forward_packed.1} parent=1 // pred_region
      %s31 = ssub.s32 2048, 2048
      %32 = vsyncadd [#allocation6], %s31
      %s33 = sshll.u32 [#allocation5], 4
      %s34 = int_to_ptr.vmem [resolvable:$true] %s33
      %39 = dma.hbm_to_vmem [thread:$0]  %s1, 2048, %s34, [#allocation6], 128, 128, 8
    $region9: #{adversarial_detector_forward_packed.1} parent=1 // pred_fallthru
      _
    // Predicated region
    $region10: #{adversarial_detector_forward_packed.1} parent=1 // pred_check
      _
    $region11: #{adversarial_detector_forward_packed.1} parent=1 // pred_check_branch
      %41 = sbr.rel (0) target = $region13
    $region12: #{adversarial_detector_forward_packed.1} parent=1 // pred_region
      _
    $region13: #{adversarial_detector_forward_packed.1} parent=1 // pred_fallthru
      _
    // Predicated region
    $region14: #{adversarial_detector_forward_packed.1} parent=1 // pred_check
      _
    $region15: #{adversarial_detector_forward_packed.1} parent=1 // pred_check_branch
      %43 = sbr.rel (0) target = $region17
    $region16: #{adversarial_detector_forward_packed.1} parent=1 // pred_region
      %s45 = ssub.s32 2048, 2048
      %46 = vsyncadd [#allocation6], %s45
      %s47 = sshll.u32 [#allocation7], 4
      %s48 = int_to_ptr.vmem [resolvable:$true] %s47
      %53 = dma.hbm_to_vmem [thread:$0]  %s3, 2048, %s48, [#allocation6], 64, 64, 4
    $region17: #{adversarial_detector_forward_packed.1} parent=1 // pred_fallthru
      _
    // Predicated region
    $region18: #{adversarial_detector_forward_packed.1} parent=1 // pred_check
      _
    $region19: #{adversarial_detector_forward_packed.1} parent=1 // pred_check_branch
      %55 = sbr.rel (0) target = $region21
    $region20: #{adversarial_detector_forward_packed.1} parent=1 // pred_region
      _
    $region21: #{adversarial_detector_forward_packed.1} parent=1 // pred_fallthru
      _
    // Predicated region
    $region22: #{adversarial_detector_forward_packed.1} parent=1 // pred_check
      _
    $region23: #{adversarial_detector_forward_packed.1} parent=1 // pred_check_branch
      %57 = sbr.rel (0) target = $region25
    $region24: #{adversarial_detector_forward_packed.1} parent=1 // pred_region
      %s59 = ssub.s32 1024, 1024
      %60 = vsyncadd [#allocation9], %s59
      %s61 = sshll.u32 [#allocation8], 4
      %s62 = int_to_ptr.vmem [resolvable:$true] %s61
      %67 = dma.hbm_to_vmem [thread:$0]  %s5, 1024, %s62, [#allocation9], 64, 64, 4
    $region25: #{adversarial_detector_forward_packed.1} parent=1 // pred_fallthru
      _
    // Predicated region
    $region26: #{adversarial_detector_forward_packed.1} parent=1 // pred_check
      _
    $region27: #{adversarial_detector_forward_packed.1} parent=1 // pred_check_branch
      %69 = sbr.rel (0) target = $region29
    $region28: #{adversarial_detector_forward_packed.1} parent=1 // pred_region
      _
    $region29: #{adversarial_detector_forward_packed.1} parent=1 // pred_fallthru
      _
    // Predicated region
    $region30: #{adversarial_detector_forward_packed.1} parent=1 // pred_check
      _
    $region31: #{adversarial_detector_forward_packed.1} parent=1 // pred_check_branch
      %71 = sbr.rel (0) target = $region33
    $region32: #{adversarial_detector_forward_packed.1} parent=1 // pred_region
      %s73 = ssub.s32 1024, 1024
      %74 = vsyncadd [#allocation9], %s73
      %s75 = sshll.u32 [#allocation10], 4
      %s76 = int_to_ptr.vmem [resolvable:$true] %s75
      %81 = dma.hbm_to_vmem [thread:$0]  %s7, 1024, %s76, [#allocation9], 64, 64, 4
    $region33: #{adversarial_detector_forward_packed.1} parent=1 // pred_fallthru
      _
    // Predicated region
    $region34: #{adversarial_detector_forward_packed.1} parent=1 // pred_check
      _
    $region35: #{adversarial_detector_forward_packed.1} parent=1 // pred_check_branch
      %83 = sbr.rel (0) target = $region37
    $region36: #{adversarial_detector_forward_packed.1} parent=1 // pred_region
      _
    $region37: #{adversarial_detector_forward_packed.1} parent=1 // pred_fallthru
      _
    // Predicated region
    $region38: #{adversarial_detector_forward_packed.1} parent=1 // pred_check
      _
    $region39: #{adversarial_detector_forward_packed.1} parent=1 // pred_check_branch
      %85 = sbr.rel (0) target = $region41
    $region40: #{adversarial_detector_forward_packed.1} parent=1 // pred_region
      %86 = dma.done [#allocation3], 128
    $region41: #{adversarial_detector_forward_packed.1} parent=1 // pred_fallthru
      _
    // Predicated region
    $region42: #{adversarial_detector_forward_packed.1} parent=1 // pred_check
      _
    $region43: #{adversarial_detector_forward_packed.1} parent=1 // pred_check_branch
      %88 = sbr.rel (0) target = $region45
    $region44: #{adversarial_detector_forward_packed.1} parent=1 // pred_region
      %89 = dma.done [#allocation6], 2048
    $region45: #{adversarial_detector_forward_packed.1} parent=1 // pred_fallthru
      _
    // Predicated region
    $region46: #{adversarial_detector_forward_packed.1} parent=1 // pred_check
      _
    $region47: #{adversarial_detector_forward_packed.1} parent=1 // pred_check_branch
      %91 = sbr.rel (0) target = $region49
    $region48: #{adversarial_detector_forward_packed.1} parent=1 // pred_region
      %92 = dma.done [#allocation6], 2048
    $region49: #{adversarial_detector_forward_packed.1} parent=1 // pred_fallthru
      _
    // Predicated region
    $region50: #{adversarial_detector_forward_packed.1} parent=1 // pred_check
      _
    $region51: #{adversarial_detector_forward_packed.1} parent=1 // pred_check_branch
      %94 = sbr.rel (0) target = $region53
    $region52: #{adversarial_detector_forward_packed.1} parent=1 // pred_region
      %95 = dma.done [#allocation9], 1024
    $region53: #{adversarial_detector_forward_packed.1} parent=1 // pred_fallthru
      _
    // Predicated region
    $region54: #{adversarial_detector_forward_packed.1} parent=1 // pred_check
      _
    $region55: #{adversarial_detector_forward_packed.1} parent=1 // pred_check_branch
      %97 = sbr.rel (0) target = $region57
    $region56: #{adversarial_detector_forward_packed.1} parent=1 // pred_region
      %98 = dma.done [#allocation9], 1024
    $region57: #{adversarial_detector_forward_packed.1} parent=1 // pred_fallthru
      _
    %v100 = vld [vmem:[#allocation2] sm:$0xff]
    %v101 = vpack.c.bf16 %v100, %v100
    %v102 = vld [vmem:[#allocation5] sm:$0xff]
    %v103 = vld [vmem:[#allocation5 + $0x8] sm:$0xff]
    %v104 = vld [vmem:[#allocation5 + $0x10] sm:$0xff]
    %v105 = vld [vmem:[#allocation5 + $0x18] sm:$0xff]
    %v106 = vld [vmem:[#allocation5 + $0x20] sm:$0xff]
    %v107 = vld [vmem:[#allocation5 + $0x28] sm:$0xff]
    %v108 = vld [vmem:[#allocation5 + $0x30] sm:$0xff]
    %v109 = vld [vmem:[#allocation5 + $0x38] sm:$0xff]
    %v110 = vld [vmem:[#allocation5 + $0x40] sm:$0xff]
    %v111 = vld [vmem:[#allocation5 + $0x48] sm:$0xff]
    %v112 = vld [vmem:[#allocation5 + $0x50] sm:$0xff]
    %v113 = vld [vmem:[#allocation5 + $0x58] sm:$0xff]
    %v114 = vld [vmem:[#allocation5 + $0x60] sm:$0xff]
    %v115 = vld [vmem:[#allocation5 + $0x68] sm:$0xff]
    %v116 = vld [vmem:[#allocation5 + $0x70] sm:$0xff]
    %v117 = vld [vmem:[#allocation5 + $0x78] sm:$0xff]
    %v118 = vld [vmem:[%s2] sm:$0x3]
    %v120 = vlaneseq
    %v121 = vshrl.u32 %v120, 7
    %v122 = vsub.s32 0, %v121
    %v123 = vrot.slane %v118, %v122
    %v124 = vlaneseq
    %v125 = vshrl.u32 %v124, 7
    %v126 = vsub.s32 1, %v125
    %v127 = vrot.slane %v118, %v126
    %v146 = vunpack.c.l.b16 %v102
    %v147 = vunpack.c.h.b16 %v102
    %v148 = vunpack.c.l.b16 %v103
    %v149 = vunpack.c.h.b16 %v103
    %v150 = vunpack.c.l.b16 %v104
    %v151 = vunpack.c.h.b16 %v104
    %v152 = vunpack.c.l.b16 %v105
    %v153 = vunpack.c.h.b16 %v105
    %v154 = vunpack.c.l.b16 %v106
    %v155 = vunpack.c.h.b16 %v106
    %v156 = vunpack.c.l.b16 %v107
    %v157 = vunpack.c.h.b16 %v107
    %v158 = vunpack.c.l.b16 %v108
    %v159 = vunpack.c.h.b16 %v108
    %v160 = vunpack.c.l.b16 %v109
    %v161 = vunpack.c.h.b16 %v109
    %v162 = vunpack.c.l.b16 %v110
    %v163 = vunpack.c.h.b16 %v110
    %v164 = vunpack.c.l.b16 %v111
    %v165 = vunpack.c.h.b16 %v111
    %v166 = vunpack.c.l.b16 %v112
    %v167 = vunpack.c.h.b16 %v112
    %v168 = vunpack.c.l.b16 %v113
    %v169 = vunpack.c.h.b16 %v113
    %v170 = vunpack.c.l.b16 %v114
    %v171 = vunpack.c.h.b16 %v114
    %v172 = vunpack.c.l.b16 %v115
    %v173 = vunpack.c.h.b16 %v115
    %v174 = vunpack.c.l.b16 %v116
    %v175 = vunpack.c.h.b16 %v116
    %v176 = vunpack.c.l.b16 %v117
    %v177 = vunpack.c.h.b16 %v117
    %v178 = vpack.c.b16 %v148, %v146
    %v179 = vpack.c.b16 %v149, %v147
    %v180 = vpack.c.b16 %v152, %v150
    %v181 = vpack.c.b16 %v153, %v151
    %v182 = vpack.c.b16 %v156, %v154
    %v183 = vpack.c.b16 %v157, %v155
    %v184 = vpack.c.b16 %v160, %v158
    %v185 = vpack.c.b16 %v161, %v159
    %v186 = vpack.c.b16 %v164, %v162
    %v187 = vpack.c.b16 %v165, %v163
    %v188 = vpack.c.b16 %v168, %v166
    %v189 = vpack.c.b16 %v169, %v167
    %v190 = vpack.c.b16 %v172, %v170
    %v191 = vpack.c.b16 %v173, %v171
    %v192 = vpack.c.b16 %v176, %v174
    %v193 = vpack.c.b16 %v177, %v175
    %210 = vmatprep.subr.bf16.mxu0 %v193
    %211 = vmatpush1.bf16.msra.mxu0 %v192
    %212 = vmatprep.subr.bf16.mxu0 %v191
    %213 = vmatpush1.bf16.msra.mxu0 %v190
    %214 = vmatprep.subr.bf16.mxu0 %v189
    %215 = vmatpush1.bf16.msra.mxu0 %v188
    %216 = vmatprep.subr.bf16.mxu0 %v187
    %217 = vmatpush1.bf16.msra.mxu0 %v186
    %218 = vmatprep.subr.bf16.mxu0 %v185
    %219 = vmatpush1.bf16.msra.mxu0 %v184
    %220 = vmatprep.subr.bf16.mxu0 %v183
    %221 = vmatpush1.bf16.msra.mxu0 %v182
    %222 = vmatprep.subr.bf16.mxu0 %v181
    %223 = vmatpush1.bf16.msra.mxu0 %v180
    %224 = vmatprep.subr.bf16.mxu0 %v179
    %225 = vmatpush1.bf16.msra.mxu0 %v178
    %226 = vmatprep.subr.bf16.mxu0 0
    %227 = vmatpush2.bf16.msra.mxu0 0
    %228 = vmatprep.subr.bf16.mxu0 0
    %229 = vmatpush2.bf16.msra.mxu0 0
    %230 = vmatprep.subr.bf16.mxu0 0
    %231 = vmatpush2.bf16.msra.mxu0 0
    %232 = vmatprep.subr.bf16.mxu0 0
    %233 = vmatpush2.bf16.msra.mxu0 0
    %234 = vmatprep.subr.bf16.mxu0 0
    %235 = vmatpush2.bf16.msra.mxu0 0
    %236 = vmatprep.subr.bf16.mxu0 0
    %237 = vmatpush2.bf16.msra.mxu0 0
    %238 = vmatprep.subr.bf16.mxu0 0
    %239 = vmatpush2.bf16.msra.mxu0 0
    %240 = vmatprep.subr.bf16.mxu0 0
    %241 = vmatpush2.bf16.msra.mxu0 0
    %242 = vmatprep.mubr.bf16.mxu0 0
    %243 = vmatmul.mubr.bf16.gmra.mxu0 %v101
    %v244 = vpop.f32.mrf.mxu0
    %v245 = vadd.f32 %v123, %v244
    %v246 = vpop.f32.mrf.mxu0
    %v247 = vadd.f32 %v127, %v246
    %v248 = vpop.f32.mrf.mxu0
    %v249 = vpop.f32.mrf.mxu0
    %250 = vdwg.mxu0
    %v251 = vmax.f32 %v245, 0.0
    %v252 = vmax.f32 %v247, 0.0
    %v253 = vpack.c.bf16 %v251, %v251
    %v254 = vpack.c.bf16 %v252, %v252
    %v255 = vld [vmem:[#allocation7] sm:$0xf]
    %v256 = vld [vmem:[#allocation7 + $0x4] sm:$0xf]
    %v257 = vld [vmem:[#allocation7 + $0x8] sm:$0xf]
    %v258 = vld [vmem:[#allocation7 + $0xc] sm:$0xf]
    %v259 = vld [vmem:[#allocation7 + $0x10] sm:$0xf]
    %v260 = vld [vmem:[#allocation7 + $0x14] sm:$0xf]
    %v261 = vld [vmem:[#allocation7 + $0x18] sm:$0xf]
    %v262 = vld [vmem:[#allocation7 + $0x1c] sm:$0xf]
    %v263 = vld [vmem:[#allocation7 + $0x20] sm:$0xf]
    %v264 = vld [vmem:[#allocation7 + $0x24] sm:$0xf]
    %v265 = vld [vmem:[#allocation7 + $0x28] sm:$0xf]
    %v266 = vld [vmem:[#allocation7 + $0x2c] sm:$0xf]
    %v267 = vld [vmem:[#allocation7 + $0x30] sm:$0xf]
    %v268 = vld [vmem:[#allocation7 + $0x34] sm:$0xf]
    %v269 = vld [vmem:[#allocation7 + $0x38] sm:$0xf]
    %v270 = vld [vmem:[#allocation7 + $0x3c] sm:$0xf]
    %v271 = vld [vmem:[#allocation7 + $0x40] sm:$0xf]
    %v272 = vld [vmem:[#allocation7 + $0x44] sm:$0xf]
    %v273 = vld [vmem:[#allocation7 + $0x48] sm:$0xf]
    %v274 = vld [vmem:[#allocation7 + $0x4c] sm:$0xf]
    %v275 = vld [vmem:[#allocation7 + $0x50] sm:$0xf]
    %v276 = vld [vmem:[#allocation7 + $0x54] sm:$0xf]
    %v277 = vld [vmem:[#allocation7 + $0x58] sm:$0xf]
    %v278 = vld [vmem:[#allocation7 + $0x5c] sm:$0xf]
    %v279 = vld [vmem:[#allocation7 + $0x60] sm:$0xf]
    %v280 = vld [vmem:[#allocation7 + $0x64] sm:$0xf]
    %v281 = vld [vmem:[#allocation7 + $0x68] sm:$0xf]
    %v282 = vld [vmem:[#allocation7 + $0x6c] sm:$0xf]
    %v283 = vld [vmem:[#allocation7 + $0x70] sm:$0xf]
    %v284 = vld [vmem:[#allocation7 + $0x74] sm:$0xf]
    %v285 = vld [vmem:[#allocation7 + $0x78] sm:$0xf]
    %v286 = vld [vmem:[#allocation7 + $0x7c] sm:$0xf]
    %v287 = vld [vmem:[%s4] sm:$0x1]
    %v289 = vlaneseq
    %v290 = vshrl.u32 %v289, 7
    %v291 = vsub.s32 0, %v290
    %v292 = vrot.slane %v287, %v291
    %v326 = vunpack.c.l.b16 %v255
    %v327 = vunpack.c.l.b16 %v256
    %v328 = vunpack.c.l.b16 %v257
    %v329 = vunpack.c.l.b16 %v258
    %v330 = vunpack.c.l.b16 %v259
    %v331 = vunpack.c.l.b16 %v260
    %v332 = vunpack.c.l.b16 %v261
    %v333 = vunpack.c.l.b16 %v262
    %v334 = vunpack.c.l.b16 %v263
    %v335 = vunpack.c.l.b16 %v264
    %v336 = vunpack.c.l.b16 %v265
    %v337 = vunpack.c.l.b16 %v266
    %v338 = vunpack.c.l.b16 %v267
    %v339 = vunpack.c.l.b16 %v268
    %v340 = vunpack.c.l.b16 %v269
    %v341 = vunpack.c.l.b16 %v270
    %v342 = vunpack.c.l.b16 %v271
    %v343 = vunpack.c.l.b16 %v272
    %v344 = vunpack.c.l.b16 %v273
    %v345 = vunpack.c.l.b16 %v274
    %v346 = vunpack.c.l.b16 %v275
    %v347 = vunpack.c.l.b16 %v276
    %v348 = vunpack.c.l.b16 %v277
    %v349 = vunpack.c.l.b16 %v278
    %v350 = vunpack.c.l.b16 %v279
    %v351 = vunpack.c.l.b16 %v280
    %v352 = vunpack.c.l.b16 %v281
    %v353 = vunpack.c.l.b16 %v282
    %v354 = vunpack.c.l.b16 %v283
    %v355 = vunpack.c.l.b16 %v284
    %v356 = vunpack.c.l.b16 %v285
    %v357 = vunpack.c.l.b16 %v286
    %v358 = vpack.c.b16 %v327, %v326
    %v359 = vpack.c.b16 %v329, %v328
    %v360 = vpack.c.b16 %v331, %v330
    %v361 = vpack.c.b16 %v333, %v332
    %v362 = vpack.c.b16 %v335, %v334
    %v363 = vpack.c.b16 %v337, %v336
    %v364 = vpack.c.b16 %v339, %v338
    %v365 = vpack.c.b16 %v341, %v340
    %v366 = vpack.c.b16 %v343, %v342
    %v367 = vpack.c.b16 %v345, %v344
    %v368 = vpack.c.b16 %v347, %v346
    %v369 = vpack.c.b16 %v349, %v348
    %v370 = vpack.c.b16 %v351, %v350
    %v371 = vpack.c.b16 %v353, %v352
    %v372 = vpack.c.b16 %v355, %v354
    %v373 = vpack.c.b16 %v357, %v356
    %390 = vmatprep.subr.bf16.mxu0 0
    %391 = vmatpush1.bf16.msra.mxu0 %v365
    %392 = vmatprep.subr.bf16.mxu0 0
    %393 = vmatpush1.bf16.msra.mxu0 %v364
    %394 = vmatprep.subr.bf16.mxu0 0
    %395 = vmatpush1.bf16.msra.mxu0 %v363
    %396 = vmatprep.subr.bf16.mxu0 0
    %397 = vmatpush1.bf16.msra.mxu0 %v362
    %398 = vmatprep.subr.bf16.mxu0 0
    %399 = vmatpush1.bf16.msra.mxu0 %v361
    %400 = vmatprep.subr.bf16.mxu0 0
    %401 = vmatpush1.bf16.msra.mxu0 %v360
    %402 = vmatprep.subr.bf16.mxu0 0
    %403 = vmatpush1.bf16.msra.mxu0 %v359
    %404 = vmatprep.subr.bf16.mxu0 0
    %405 = vmatpush1.bf16.msra.mxu0 %v358
    %406 = vmatprep.subr.bf16.mxu0 0
    %407 = vmatpush2.bf16.msra.mxu0 %v373
    %408 = vmatprep.subr.bf16.mxu0 0
    %409 = vmatpush2.bf16.msra.mxu0 %v372
    %410 = vmatprep.subr.bf16.mxu0 0
    %411 = vmatpush2.bf16.msra.mxu0 %v371
    %412 = vmatprep.subr.bf16.mxu0 0
    %413 = vmatpush2.bf16.msra.mxu0 %v370
    %414 = vmatprep.subr.bf16.mxu0 0
    %415 = vmatpush2.bf16.msra.mxu0 %v369
    %416 = vmatprep.subr.bf16.mxu0 0
    %417 = vmatpush2.bf16.msra.mxu0 %v368
    %418 = vmatprep.subr.bf16.mxu0 0
    %419 = vmatpush2.bf16.msra.mxu0 %v367
    %420 = vmatprep.subr.bf16.mxu0 0
    %421 = vmatpush2.bf16.msra.mxu0 %v366
    %422 = vmatprep.mubr.bf16.mxu0 %v254
    %423 = vmatmul.mubr.bf16.gmra.mxu0 %v253
    %v424 = vpop.f32.mrf.mxu0
    %v425 = vadd.f32 %v292, %v424
    %v426 = vpop.f32.mrf.mxu0
    %v427 = vpop.f32.mrf.mxu0
    %v428 = vpop.f32.mrf.mxu0
    %429 = vdwg.mxu0
    %v430 = vmax.f32 %v425, 0.0
    %v431 = vpack.c.bf16 %v430, %v430
    %v432 = vld [vmem:[#allocation8] sm:$0xf]
    %v433 = vld [vmem:[#allocation8 + $0x4] sm:$0xf]
    %v434 = vld [vmem:[#allocation8 + $0x8] sm:$0xf]
    %v435 = vld [vmem:[#allocation8 + $0xc] sm:$0xf]
    %v436 = vld [vmem:[#allocation8 + $0x10] sm:$0xf]
    %v437 = vld [vmem:[#allocation8 + $0x14] sm:$0xf]
    %v438 = vld [vmem:[#allocation8 + $0x18] sm:$0xf]
    %v439 = vld [vmem:[#allocation8 + $0x1c] sm:$0xf]
    %v440 = vld [vmem:[#allocation8 + $0x20] sm:$0xf]
    %v441 = vld [vmem:[#allocation8 + $0x24] sm:$0xf]
    %v442 = vld [vmem:[#allocation8 + $0x28] sm:$0xf]
    %v443 = vld [vmem:[#allocation8 + $0x2c] sm:$0xf]
    %v444 = vld [vmem:[#allocation8 + $0x30] sm:$0xf]
    %v445 = vld [vmem:[#allocation8 + $0x34] sm:$0xf]
    %v446 = vld [vmem:[#allocation8 + $0x38] sm:$0xf]
    %v447 = vld [vmem:[#allocation8 + $0x3c] sm:$0xf]
    %v448 = vld [vmem:[%s6] sm:$0x1]
    %v450 = vlaneseq
    %v451 = vshrl.u32 %v450, 7
    %v452 = vsub.s32 0, %v451
    %v453 = vrot.slane %v448, %v452
    %v471 = vunpack.c.l.b16 %v432
    %v472 = vunpack.c.l.b16 %v433
    %v473 = vunpack.c.l.b16 %v434
    %v474 = vunpack.c.l.b16 %v435
    %v475 = vunpack.c.l.b16 %v436
    %v476 = vunpack.c.l.b16 %v437
    %v477 = vunpack.c.l.b16 %v438
    %v478 = vunpack.c.l.b16 %v439
    %v479 = vunpack.c.l.b16 %v440
    %v480 = vunpack.c.l.b16 %v441
    %v481 = vunpack.c.l.b16 %v442
    %v482 = vunpack.c.l.b16 %v443
    %v483 = vunpack.c.l.b16 %v444
    %v484 = vunpack.c.l.b16 %v445
    %v485 = vunpack.c.l.b16 %v446
    %v486 = vunpack.c.l.b16 %v447
    %v487 = vpack.c.b16 %v472, %v471
    %v488 = vpack.c.b16 %v474, %v473
    %v489 = vpack.c.b16 %v476, %v475
    %v490 = vpack.c.b16 %v478, %v477
    %v491 = vpack.c.b16 %v480, %v479
    %v492 = vpack.c.b16 %v482, %v481
    %v493 = vpack.c.b16 %v484, %v483
    %v494 = vpack.c.b16 %v486, %v485
    %503 = vmatprep.subr.bf16.mxu0 0
    %504 = vmatpush1.bf16.msra.mxu0 %v494
    %505 = vmatprep.subr.bf16.mxu0 0
    %506 = vmatpush1.bf16.msra.mxu0 %v493
    %507 = vmatprep.subr.bf16.mxu0 0
    %508 = vmatpush1.bf16.msra.mxu0 %v492
    %509 = vmatprep.subr.bf16.mxu0 0
    %510 = vmatpush1.bf16.msra.mxu0 %v491
    %511 = vmatprep.subr.bf16.mxu0 0
    %512 = vmatpush1.bf16.msra.mxu0 %v490
    %513 = vmatprep.subr.bf16.mxu0 0
    %514 = vmatpush1.bf16.msra.mxu0 %v489
    %515 = vmatprep.subr.bf16.mxu0 0
    %516 = vmatpush1.bf16.msra.mxu0 %v488
    %517 = vmatprep.subr.bf16.mxu0 0
    %518 = vmatpush1.bf16.msra.mxu0 %v487
    %519 = vmatprep.subr.bf16.mxu0 0
    %520 = vmatpush2.bf16.msra.mxu0 0
    %521 = vmatprep.subr.bf16.mxu0 0
    %522 = vmatpush2.bf16.msra.mxu0 0
    %523 = vmatprep.subr.bf16.mxu0 0
    %524 = vmatpush2.bf16.msra.mxu0 0
    %525 = vmatprep.subr.bf16.mxu0 0
    %526 = vmatpush2.bf16.msra.mxu0 0
    %527 = vmatprep.subr.bf16.mxu0 0
    %528 = vmatpush2.bf16.msra.mxu0 0
    %529 = vmatprep.subr.bf16.mxu0 0
    %530 = vmatpush2.bf16.msra.mxu0 0
    %531 = vmatprep.subr.bf16.mxu0 0
    %532 = vmatpush2.bf16.msra.mxu0 0
    %533 = vmatprep.subr.bf16.mxu0 0
    %534 = vmatpush2.bf16.msra.mxu0 0
    %535 = vmatprep.mubr.bf16.mxu0 0
    %536 = vmatmul.mubr.bf16.gmra.mxu0 %v431
    %v537 = vpop.f32.mrf.mxu0
    %v538 = vadd.f32 %v453, %v537
    %v539 = vpop.f32.mrf.mxu0
    %v540 = vpop.f32.mrf.mxu0
    %v541 = vpop.f32.mrf.mxu0
    %542 = vdwg.mxu0
    %v543 = vmax.f32 %v538, 0.0
    %v544 = vpack.c.bf16 %v543, %v543
    %v545 = vld [vmem:[#allocation10] sm:$0xf]
    %v546 = vld [vmem:[#allocation10 + $0x4] sm:$0xf]
    %v547 = vld [vmem:[#allocation10 + $0x8] sm:$0xf]
    %v548 = vld [vmem:[#allocation10 + $0xc] sm:$0xf]
    %v549 = vld [vmem:[#allocation10 + $0x10] sm:$0xf]
    %v550 = vld [vmem:[#allocation10 + $0x14] sm:$0xf]
    %v551 = vld [vmem:[#allocation10 + $0x18] sm:$0xf]
    %v552 = vld [vmem:[#allocation10 + $0x1c] sm:$0xf]
    %v553 = vld [vmem:[#allocation10 + $0x20] sm:$0xf]
    %v554 = vld [vmem:[#allocation10 + $0x24] sm:$0xf]
    %v555 = vld [vmem:[#allocation10 + $0x28] sm:$0xf]
    %v556 = vld [vmem:[#allocation10 + $0x2c] sm:$0xf]
    %v557 = vld [vmem:[#allocation10 + $0x30] sm:$0xf]
    %v558 = vld [vmem:[#allocation10 + $0x34] sm:$0xf]
    %v559 = vld [vmem:[#allocation10 + $0x38] sm:$0xf]
    %v560 = vld [vmem:[#allocation10 + $0x3c] sm:$0xf]
    %v561 = vld [vmem:[%s8] sm:$0x1]
    %v563 = vlaneseq
    %v564 = vshrl.u32 %v563, 7
    %v565 = vsub.s32 0, %v564
    %v566 = vrot.slane %v561, %v565
    %v584 = vunpack.c.l.b16 %v545
    %v585 = vunpack.c.l.b16 %v546
    %v586 = vunpack.c.l.b16 %v547
    %v587 = vunpack.c.l.b16 %v548
    %v588 = vunpack.c.l.b16 %v549
    %v589 = vunpack.c.l.b16 %v550
    %v590 = vunpack.c.l.b16 %v551
    %v591 = vunpack.c.l.b16 %v552
    %v592 = vunpack.c.l.b16 %v553
    %v593 = vunpack.c.l.b16 %v554
    %v594 = vunpack.c.l.b16 %v555
    %v595 = vunpack.c.l.b16 %v556
    %v596 = vunpack.c.l.b16 %v557
    %v597 = vunpack.c.l.b16 %v558
    %v598 = vunpack.c.l.b16 %v559
    %v599 = vunpack.c.l.b16 %v560
    %v600 = vpack.c.b16 %v585, %v584
    %v601 = vpack.c.b16 %v587, %v586
    %v602 = vpack.c.b16 %v589, %v588
    %v603 = vpack.c.b16 %v591, %v590
    %v604 = vpack.c.b16 %v593, %v592
    %v605 = vpack.c.b16 %v595, %v594
    %v606 = vpack.c.b16 %v597, %v596
    %v607 = vpack.c.b16 %v599, %v598
    %616 = vmatprep.subr.bf16.mxu0 0
    %617 = vmatpush1.bf16.msra.mxu0 %v607
    %618 = vmatprep.subr.bf16.mxu0 0
    %619 = vmatpush1.bf16.msra.mxu0 %v606
    %620 = vmatprep.subr.bf16.mxu0 0
    %621 = vmatpush1.bf16.msra.mxu0 %v605
    %622 = vmatprep.subr.bf16.mxu0 0
    %623 = vmatpush1.bf16.msra.mxu0 %v604
    %624 = vmatprep.subr.bf16.mxu0 0
    %625 = vmatpush1.bf16.msra.mxu0 %v603
    %626 = vmatprep.subr.bf16.mxu0 0
    %627 = vmatpush1.bf16.msra.mxu0 %v602
    %628 = vmatprep.subr.bf16.mxu0 0
    %629 = vmatpush1.bf16.msra.mxu0 %v601
    %630 = vmatprep.subr.bf16.mxu0 0
    %631 = vmatpush1.bf16.msra.mxu0 %v600
    %632 = vmatprep.subr.bf16.mxu0 0
    %633 = vmatpush2.bf16.msra.mxu0 0
    %634 = vmatprep.subr.bf16.mxu0 0
    %635 = vmatpush2.bf16.msra.mxu0 0
    %636 = vmatprep.subr.bf16.mxu0 0
    %637 = vmatpush2.bf16.msra.mxu0 0
    %638 = vmatprep.subr.bf16.mxu0 0
    %639 = vmatpush2.bf16.msra.mxu0 0
    %640 = vmatprep.subr.bf16.mxu0 0
    %641 = vmatpush2.bf16.msra.mxu0 0
    %642 = vmatprep.subr.bf16.mxu0 0
    %643 = vmatpush2.bf16.msra.mxu0 0
    %644 = vmatprep.subr.bf16.mxu0 0
    %645 = vmatpush2.bf16.msra.mxu0 0
    %646 = vmatprep.subr.bf16.mxu0 0
    %647 = vmatpush2.bf16.msra.mxu0 0
    %648 = vmatprep.mubr.bf16.mxu0 0
    %649 = vmatmul.mubr.bf16.gmra.mxu0 %v544
    %v650 = vpop.f32.mrf.mxu0
    %v651 = vadd.f32 %v566, %v650
    %v652 = vpop.f32.mrf.mxu0
    %v653 = vpop.f32.mrf.mxu0
    %v654 = vpop.f32.mrf.mxu0
    %655 = vdwg.mxu0
    %v656 = vlaneseq
    %v657 = vand.u32 %v656, 127
    %vm658 = vcmp.ge.s32.totalorder %v657, 64
    %vm659 = vcmp.lt.s32.totalorder %v657, 68
    %vm660 = vmand %vm658, %vm659
    %vm661 = vcmp.eq.s32.totalorder %v657, 68
    %v662 = vsel %vm660, %v651, -1e+30
    %663 = vmax.xlane.f32.xlu0 %v662
    %v664 = vpop.xlane.xlu0 %663
    %v665 = vsub.f32 %v651, %v664
    %v666 = vmul.f32 %v665, 1.442695
    %v667 = vpow.pop %v666
    %v668 = vsel %vm660, %v667, 0.0
    %669 = vadd.xlane.f32.xlu0 %v668
    %v670 = vpop.xlane.xlu0 %669
    %v671 = vrcp.pop %v670
    %v672 = vmul.f32 %v668, %v671
    %v673 = vsub.f32 0.0, %v651
    %v674 = vmul.f32 %v673, 1.442695
    %v675 = vpow.pop %v674
    %v676 = vadd.f32 %v675, 1.0
    %v677 = vrcp.pop %v676
    %v678 = vsel %vm661, %v677, 0.0
    %v679 = vsel %vm660, %v672, %v678
    %vm680 = vcmp.lt.s32.totalorder %v657, 64
    %v681 = vsel %vm680, %v538, %v679
    %v682 = vpack.c.bf16 %v681, %v681
    %683 = vst [vmem:[#allocation11] sm:$0xf] %v682
    // Predicated region
    $region58: #{adversarial_detector_forward_packed.1} parent=1 // pred_check
      _
    $region59: #{adversarial_detector_forward_packed.1} parent=1 // pred_check_branch
      %685 = sbr.rel (0) target = $region61
    $region60: #{adversarial_detector_forward_packed.1} parent=1 // pred_region
      %s687 = ssub.s32 64, 64
      %688 = vsyncadd [#allocation4], %s687
      %s690 = sshll.u32 [#allocation11], 4
      %s691 = int_to_ptr.vmem [resolvable:$true] %s690
      %693 = dma.vmem_to_hbm [thread:$0]  %s691, 64, %s9, [#allocation4]
    $region61: #{adversarial_detector_forward_packed.1} parent=1 // pred_fallthru
      _
    // Predicated region
    $region62: #{adversarial_detector_forward_packed.1} parent=1 // pred_check
      _
    $region63: #{adversarial_detector_forward_packed.1} parent=1 // pred_check_branch
      %695 = sbr.rel (0) target = $region65
    $region64: #{adversarial_detector_forward_packed.1} parent=1 // pred_region
      %696 = dma.done [#allocation4], 64
    $region65: #{adversarial_detector_forward_packed.1} parent=1 // pred_fallthru
      _
    %697 = vsyncpa [#allocation3], 1
    %698 = vsyncpa [#allocation6], 1
    %699 = vsyncpa [#allocation9], 1
    %700 = vsyncpa [#allocation4], 1

</llo_original>
